<compile_context>
chip_gen: v5e
topology: v5e:2x2
jax: 0.10.0
libtpu: 0.0.40
codegen_flags: <defaults>
</compile_context>

<pallas_src>
import math

import jax
import jax.numpy as jnp
import numpy as np
from jax.experimental import pallas as pl
from jax.experimental.pallas import tpu as pltpu

# configuration consistent with the module's constructor (input_length, dim, dropout)
B = 2       # batch
L = 128     # input_length  (multiple of 128 -> lane-dense, unmasked output stores)
D = 16      # dim
K = 5       # Conv1d kernel_size (fixed by the module)
PAD = K // 2


# ----------------------------------------------------------------------------
# Pallas kernel: the whole forward in one invocation (no grid).
#   xt_ref:    (B, D, L)   input, channel-major (time in lanes)
#   wflat_ref: (D, K*D)    packed conv taps: wflat[o, k*D + c] = W[o, c, k]
#   out_ref:   (B, L, L)   softmax'd cross-time graph
# ----------------------------------------------------------------------------
def time_generate_graph_kernel(xt_ref, wflat_ref, out_ref):
    bsz, dim, seq = xt_ref.shape
    ktaps = wflat_ref.shape[1] // dim
    pad = ktaps // 2

    # ---- circular Conv1d over time as ONE deep MXU matmul ------------------
    # Build the circulant im2col operand (K*D, B*L) from per-batch lane rolls.
    # Each roll is a per-vreg lane rotate of a (16, 128) tile (2 vregs) -> cheap XLU.
    bcols = []
    for b in range(bsz):                                   # bsz is small & static
        xb = xt_ref[b].astype(jnp.float32)                 # (D, L)
        taps = []
        for k in range(ktaps):
            shift = (pad - k) % seq                        # out[t] <- x[(t + k - pad) mod L]
            taps.append(xb if shift == 0 else pltpu.roll(xb, shift, axis=1))
        bcols.append(jnp.concatenate(taps, axis=0))        # (K*D, L)  sublane stack
    xp = jnp.concatenate(bcols, axis=1)                    # (K*D, B*L) lane stack (batch fused)

    # y_all[o, b*L + t] = sum_{c,k} W[o,c,k] * x[b, (t + k - pad) mod L, c]
    y_all = jnp.dot(wflat_ref[...], xp,
                    preferred_element_type=jnp.float32)    # (D, B*L) = (16, 256)

    inv_seq = 1.0 / seq
    qscale = float(dim) ** -0.25    # fold 1/sqrt(D): (q*yn)^T (q*yn) = yn^T yn / sqrt(D)

    def normalized_scores(b):
        yb = y_all[:, b * seq:(b + 1) * seq]               # (D, L), vreg-aligned lane slice
        # ---- normalize over the time (lane) axis: biased variance, eps = 1e-5 ----
        mean = jnp.sum(yb, axis=1, keepdims=True) * inv_seq          # (D, 1)
        ctr = yb - mean
        var = jnp.sum(ctr * ctr, axis=1, keepdims=True) * inv_seq    # (D, 1)
        yn = ctr * (jax.lax.rsqrt(var + 1e-5) * qscale)              # (D, L), scale folded in
        # ---- scores[l, s] = sum_e yn[e, l] * yn[e, s] (already * 1/sqrt(D)) ----
        return jax.lax.dot_general(yn, yn, (((0,), (0,)), ((), ())),
                                   preferred_element_type=jnp.float32)  # (L, L)

    # ---- softmax over the batch axis (dim=-3); dropout = identity in eval ----
    if bsz == 2:
        # exact closed form: out0 = exp(s0)/(exp(s0)+exp(s1)) = sigmoid(s0 - s1)
        s0 = normalized_scores(0)
        s1 = normalized_scores(1)
        p0 = 1.0 / (1.0 + jnp.exp(s1 - s0))
        out_ref[0] = p0.astype(out_ref.dtype)
        out_ref[1] = (1.0 - p0).astype(out_ref.dtype)
    else:
        # general fallback: stream exp into out_ref, renormalize in place
        scores = [normalized_scores(b) for b in range(bsz)]
        m = scores[0]
        for b in range(1, bsz):
            m = jnp.maximum(m, scores[b])
        denom = jnp.zeros_like(m)
        for b in range(bsz):
            eb = jnp.exp(scores[b] - m)
            out_ref[b] = eb.astype(out_ref.dtype)
            denom = denom + eb
        recip = 1.0 / denom
        for b in range(bsz):
            out_ref[b] = (out_ref[b] * recip).astype(out_ref.dtype)


# ----------------------------------------------------------------------------
# wrapper: only layout plumbing (transpose to channel-major) + one pallas_call.
# The packed weight is built ONCE outside the jitted per-call path.
# ----------------------------------------------------------------------------
def make_packed_weight(conv_w):
    # wflat[o, k*D + c] = conv_w[o, c, k]
    d_out, d_in, k = conv_w.shape
    return jnp.transpose(conv_w, (0, 2, 1)).reshape(d_out, k * d_in)   # (D, K*D)


def time_generate_graph(x, wflat):
    bsz, seq, dim = x.shape
    xt = jnp.transpose(x, (0, 2, 1))                        # (B, D, L): time in lanes
    return pl.pallas_call(
        time_generate_graph_kernel,
        out_shape=jax.ShapeDtypeStruct((bsz, seq, seq), jnp.float32),
    )(xt, wflat)


forward = jax.jit(time_generate_graph)


# ----------------------------------------------------------------------------
# pure-JAX reference (direct transcription of the PyTorch forward, eval mode)
# ----------------------------------------------------------------------------
def reference_forward(x, conv_w):
    bsz, seq, dim = x.shape
    xn = jnp.transpose(x, (0, 2, 1))                        # (B, D, L)  NCW
    xp = jnp.concatenate([xn[:, :, -PAD:], xn, xn[:, :, :PAD]], axis=-1)  # circular pad
    y = jnp.zeros((bsz, dim, seq), jnp.float32)
    for k in range(K):
        y = y + jnp.einsum('oc,bcw->bow', conv_w[:, :, k], xp[:, :, k:k + seq])
    y = jnp.transpose(y, (0, 2, 1))                         # (B, L, D)
    mean = y.mean(axis=1, keepdims=True)
    var = y.var(axis=1, keepdims=True)                      # unbiased=False
    yn = (y - mean) / jnp.sqrt(var + 1e-5)
    scores = jnp.einsum('ble,bse->bls', yn, yn) / math.sqrt(dim)
    return jax.nn.softmax(scores, axis=0)                   # F.softmax(..., dim=-3)


# ----------------------------------------------------------------------------
if __name__ == "__main__":
    key = jax.random.PRNGKey(0)
    kx, kw = jax.random.split(key)
    x = jax.random.normal(kx, (B, L, D), jnp.float32)
    # PyTorch Conv1d default init: U(-s, s), s = 1/sqrt(in_channels * kernel_size)
    s = 1.0 / math.sqrt(D * K)
    conv_w = jax.random.uniform(kw, (D, D, K), jnp.float32, minval=-s, maxval=s)

    wflat = make_packed_weight(conv_w)                      # hoisted out of the per-call path

    out = jax.block_until_ready(forward(x, wflat))
    assert out.shape == (B, L, L), out.shape

    ref = jax.block_until_ready(reference_forward(x, conv_w))
    max_err = float(jnp.max(jnp.abs(out - ref)))
    if not np.allclose(np.asarray(out), np.asarray(ref), rtol=2e-3, atol=2e-3):
        raise AssertionError(f"Pallas kernel mismatch vs reference, max abs err {max_err:.3e}")

    print("KERNEL_OK")
</pallas_src>

<mosaic_0001>
module attributes {stable_mosaic.version = 11 : i64} {
  func.func @time_generate_graph_kernel(%arg0: memref<2x16x128xf32, #tpu.memory_space<vmem>>, %arg1: memref<16x80xf32, #tpu.memory_space<vmem>>, %arg2: memref<2x128x128xf32, #tpu.memory_space<vmem>>) attributes {dimension_semantics = [], scalar_prefetch = 0 : i64, scratch_operands = 0 : i64, tpu.core_type = #tpu.core_type<tc>} {
    %c0 = arith.constant 0 : index
    %c0_0 = arith.constant 0 : index
    %c0_1 = arith.constant 0 : index
    %0 = vector.load %arg0[%c0, %c0_0, %c0_1] : memref<2x16x128xf32, #tpu.memory_space<vmem>>, vector<1x16x128xf32>
    %1 = vector.shape_cast %0 : vector<1x16x128xf32> to vector<16x128xf32>
    %c2_i32 = arith.constant 2 : i32
    %2 = tpu.dynamic_rotate %1 by %c2_i32 dim 1 : vector<16x128xf32>, i32 -> vector<16x128xf32>
    %c1_i32 = arith.constant 1 : i32
    %3 = tpu.dynamic_rotate %1 by %c1_i32 dim 1 : vector<16x128xf32>, i32 -> vector<16x128xf32>
    %c127_i32 = arith.constant 127 : i32
    %4 = tpu.dynamic_rotate %1 by %c127_i32 dim 1 : vector<16x128xf32>, i32 -> vector<16x128xf32>
    %c126_i32 = arith.constant 126 : i32
    %5 = tpu.dynamic_rotate %1 by %c126_i32 dim 1 : vector<16x128xf32>, i32 -> vector<16x128xf32>
    %6 = tpu.concatenate %2, %3, %1, %4, %5 in 0 : vector<16x128xf32>, vector<16x128xf32>, vector<16x128xf32>, vector<16x128xf32>, vector<16x128xf32> -> vector<80x128xf32>
    %c1 = arith.constant 1 : index
    %c0_2 = arith.constant 0 : index
    %c0_3 = arith.constant 0 : index
    %7 = vector.load %arg0[%c1, %c0_2, %c0_3] : memref<2x16x128xf32, #tpu.memory_space<vmem>>, vector<1x16x128xf32>
    %8 = vector.shape_cast %7 : vector<1x16x128xf32> to vector<16x128xf32>
    %c2_i32_4 = arith.constant 2 : i32
    %9 = tpu.dynamic_rotate %8 by %c2_i32_4 dim 1 : vector<16x128xf32>, i32 -> vector<16x128xf32>
    %c1_i32_5 = arith.constant 1 : i32
    %10 = tpu.dynamic_rotate %8 by %c1_i32_5 dim 1 : vector<16x128xf32>, i32 -> vector<16x128xf32>
    %c127_i32_6 = arith.constant 127 : i32
    %11 = tpu.dynamic_rotate %8 by %c127_i32_6 dim 1 : vector<16x128xf32>, i32 -> vector<16x128xf32>
    %c126_i32_7 = arith.constant 126 : i32
    %12 = tpu.dynamic_rotate %8 by %c126_i32_7 dim 1 : vector<16x128xf32>, i32 -> vector<16x128xf32>
    %13 = tpu.concatenate %9, %10, %8, %11, %12 in 0 : vector<16x128xf32>, vector<16x128xf32>, vector<16x128xf32>, vector<16x128xf32>, vector<16x128xf32> -> vector<80x128xf32>
    %14 = tpu.concatenate %6, %13 in 1 : vector<80x128xf32>, vector<80x128xf32> -> vector<80x256xf32>
    %c0_8 = arith.constant 0 : index
    %c0_9 = arith.constant 0 : index
    %15 = vector.load %arg1[%c0_8, %c0_9] : memref<16x80xf32, #tpu.memory_space<vmem>>, vector<16x80xf32>
    %cst = arith.constant dense<0.000000e+00> : vector<16x256xf32>
    %16 = tpu.matmul %15, %14, %cst {dimension_numbers = #tpu.dot_dimension_numbers<[1], [0], [0], [1], [0, 0, 1, 1], [], []>} : vector<16x80xf32>, vector<80x256xf32>, vector<16x256xf32> -> vector<16x256xf32>
    %17 = vector.extract_strided_slice %16 {offsets = [0, 0], sizes = [16, 128], strides = [1, 1]} : vector<16x256xf32> to vector<16x128xf32>
    %cst_10 = arith.constant dense<0.000000e+00> : vector<16xf32>
    %18 = vector.multi_reduction <add>, %17, %cst_10 [1] : vector<16x128xf32> to vector<16xf32>
    %19 = vector.shape_cast %18 : vector<16xf32> to vector<16x1xf32>
    %cst_11 = arith.constant 7.812500e-03 : f32
    %20 = vector.broadcast %cst_11 : f32 to vector<16x1xf32>
    %21 = arith.mulf %19, %20 : vector<16x1xf32>
    %22 = vector.broadcast %21 : vector<16x1xf32> to vector<16x128xf32>
    %23 = arith.subf %17, %22 : vector<16x128xf32>
    %24 = arith.mulf %23, %23 : vector<16x128xf32>
    %cst_12 = arith.constant dense<0.000000e+00> : vector<16xf32>
    %25 = vector.multi_reduction <add>, %24, %cst_12 [1] : vector<16x128xf32> to vector<16xf32>
    %26 = vector.shape_cast %25 : vector<16xf32> to vector<16x1xf32>
    %cst_13 = arith.constant 7.812500e-03 : f32
    %27 = vector.broadcast %cst_13 : f32 to vector<16x1xf32>
    %28 = arith.mulf %26, %27 : vector<16x1xf32>
    %cst_14 = arith.constant 9.99999974E-6 : f32
    %29 = vector.broadcast %cst_14 : f32 to vector<16x1xf32>
    %30 = arith.addf %28, %29 : vector<16x1xf32>
    %31 = math.rsqrt %30 : vector<16x1xf32>
    %cst_15 = arith.constant 5.000000e-01 : f32
    %32 = vector.broadcast %cst_15 : f32 to vector<16x1xf32>
    %33 = arith.mulf %31, %32 : vector<16x1xf32>
    %34 = vector.broadcast %33 : vector<16x1xf32> to vector<16x128xf32>
    %35 = arith.mulf %23, %34 : vector<16x128xf32>
    %cst_16 = arith.constant dense<0.000000e+00> : vector<128x128xf32>
    %36 = tpu.matmul %35, %35, %cst_16 {dimension_numbers = #tpu.dot_dimension_numbers<[0], [0], [1], [1], [0, 1, 1, 1], [], []>} : vector<16x128xf32>, vector<16x128xf32>, vector<128x128xf32> -> vector<128x128xf32>
    %37 = vector.extract_strided_slice %16 {offsets = [0, 128], sizes = [16, 128], strides = [1, 1]} : vector<16x256xf32> to vector<16x128xf32>
    %cst_17 = arith.constant dense<0.000000e+00> : vector<16xf32>
    %38 = vector.multi_reduction <add>, %37, %cst_17 [1] : vector<16x128xf32> to vector<16xf32>
    %39 = vector.shape_cast %38 : vector<16xf32> to vector<16x1xf32>
    %cst_18 = arith.constant 7.812500e-03 : f32
    %40 = vector.broadcast %cst_18 : f32 to vector<16x1xf32>
    %41 = arith.mulf %39, %40 : vector<16x1xf32>
    %42 = vector.broadcast %41 : vector<16x1xf32> to vector<16x128xf32>
    %43 = arith.subf %37, %42 : vector<16x128xf32>
    %44 = arith.mulf %43, %43 : vector<16x128xf32>
    %cst_19 = arith.constant dense<0.000000e+00> : vector<16xf32>
    %45 = vector.multi_reduction <add>, %44, %cst_19 [1] : vector<16x128xf32> to vector<16xf32>
    %46 = vector.shape_cast %45 : vector<16xf32> to vector<16x1xf32>
    %cst_20 = arith.constant 7.812500e-03 : f32
    %47 = vector.broadcast %cst_20 : f32 to vector<16x1xf32>
    %48 = arith.mulf %46, %47 : vector<16x1xf32>
    %cst_21 = arith.constant 9.99999974E-6 : f32
    %49 = vector.broadcast %cst_21 : f32 to vector<16x1xf32>
    %50 = arith.addf %48, %49 : vector<16x1xf32>
    %51 = math.rsqrt %50 : vector<16x1xf32>
    %cst_22 = arith.constant 5.000000e-01 : f32
    %52 = vector.broadcast %cst_22 : f32 to vector<16x1xf32>
    %53 = arith.mulf %51, %52 : vector<16x1xf32>
    %54 = vector.broadcast %53 : vector<16x1xf32> to vector<16x128xf32>
    %55 = arith.mulf %43, %54 : vector<16x128xf32>
    %cst_23 = arith.constant dense<0.000000e+00> : vector<128x128xf32>
    %56 = tpu.matmul %55, %55, %cst_23 {dimension_numbers = #tpu.dot_dimension_numbers<[0], [0], [1], [1], [0, 1, 1, 1], [], []>} : vector<16x128xf32>, vector<16x128xf32>, vector<128x128xf32> -> vector<128x128xf32>
    %57 = arith.subf %56, %36 : vector<128x128xf32>
    %58 = math.exp %57 : vector<128x128xf32>
    %cst_24 = arith.constant 1.000000e+00 : f32
    %59 = vector.broadcast %cst_24 : f32 to vector<128x128xf32>
    %60 = arith.addf %59, %58 : vector<128x128xf32>
    %cst_25 = arith.constant 1.000000e+00 : f32
    %61 = vector.broadcast %cst_25 : f32 to vector<128x128xf32>
    %62 = arith.divf %61, %60 : vector<128x128xf32>
    %c0_26 = arith.constant 0 : index
    %c0_27 = arith.constant 0 : index
    %c0_28 = arith.constant 0 : index
    %63 = vector.load %arg2[%c0_26, %c0_27, %c0_28] : memref<2x128x128xf32, #tpu.memory_space<vmem>>, vector<1x128x128xf32>
    %64 = vector.shape_cast %63 : vector<1x128x128xf32> to vector<128x128xf32>
    %65 = vector.shape_cast %62 : vector<128x128xf32> to vector<1x128x128xf32>
    tpu.vector_store %arg2[%c0_26, %c0_27, %c0_28], %65 {strides = array<i32>} : memref<2x128x128xf32, #tpu.memory_space<vmem>>, vector<1x128x128xf32>,
    %cst_29 = arith.constant 1.000000e+00 : f32
    %66 = vector.broadcast %cst_29 : f32 to vector<128x128xf32>
    %67 = arith.subf %66, %62 : vector<128x128xf32>
    %c1_30 = arith.constant 1 : index
    %c0_31 = arith.constant 0 : index
    %c0_32 = arith.constant 0 : index
    %68 = vector.load %arg2[%c1_30, %c0_31, %c0_32] : memref<2x128x128xf32, #tpu.memory_space<vmem>>, vector<1x128x128xf32>
    %69 = vector.shape_cast %68 : vector<1x128x128xf32> to vector<128x128xf32>
    %70 = vector.shape_cast %67 : vector<128x128xf32> to vector<1x128x128xf32>
    tpu.vector_store %arg2[%c1_30, %c0_31, %c0_32], %70 {strides = array<i32>} : memref<2x128x128xf32, #tpu.memory_space<vmem>>, vector<1x128x128xf32>,
    return
  }
}

</mosaic_0001>

<llo_original>
// kernel: time_generate_graph.1
$region0: #{time_generate_graph.1}
  #allocation0 [shape = 'u32[]', space=smem, size = 0x4, offset = 0x4, fixed_abs, tag = 'smem constant byte address 0x4 - core index']
  #allocation1 [shape = 'u32[72,128]{1,0:T(1,128)}', space=vmem, size = 0x9000, scoped, tag = 'internal scratch']
  %s0 = inlined_call_operand.hbm [shape: f32[2,16,128], index: 0, kind: input, shape index: {}]
  %s1 = inlined_call_operand.hbm [shape: f32[16,80], index: 1, kind: input, shape index: {}]
  %s2 = inlined_call_operand.hbm [shape: f32[2,128,128], index: 2, kind: output, shape index: {}]
  %s3 = sld [smem:[#allocation0]]
  $region26: #{time_generate_graph.1} parent=0
    _
  %s5 = ssub.s32 1, %s3
  %s6 = scalar_select 0, %s5, %s3
  $region1: #{time_generate_graph.1} parent=0
    #allocation2 [shape = 'u8[16384]{0}', space=vmem, size = 0x4000, scoped, tag = 'input window, operand 0, single buffered']
    #allocation3 [shape = 's32[1]{0}', space=sflag, size = 0x4, scoped, tag = 'scoped memory for time_generate_graph.1']
    #allocation4 [shape = 's32[1]{0}', space=sflag, size = 0x4, scoped, tag = 'scoped memory for time_generate_graph.1']
    #allocation5 [shape = 'u8[8192]{0}', space=vmem, size = 0x2000, scoped, tag = 'input window, operand 1, single buffered']
    #allocation6 [shape = 's32[1]{0}', space=sflag, size = 0x4, scoped, tag = 'scoped memory for time_generate_graph.1']
    #allocation7 [shape = 'u8[131072]{0}', space=vmem, size = 0x20000, scoped, tag = 'output window, operand 0, single buffered']
    %7 = vsyncpa [#allocation3], 0
    %8 = vsyncpa [#allocation6], 0
    %9 = vsyncpa [#allocation4], 0
    // Predicated region
    $region2: #{time_generate_graph.1} parent=1 // pred_check
      _
    $region3: #{time_generate_graph.1} parent=1 // pred_check_branch
      %11 = sbr.rel (0) target = $region5
    $region4: #{time_generate_graph.1} parent=1 // pred_region
      %13 = vsyncadd [#allocation3], 0
      %s14 = sshll.u32 %s0, 4
      %s15 = int_to_ptr.hbm [resolvable:$true] %s14
      %s16 = sshll.u32 [#allocation2], 4
      %s17 = int_to_ptr.vmem [resolvable:$true] %s16
      %22 = dma.hbm_to_vmem [thread:$0]  %s15, 512, %s17, [#allocation3], 128, 128, 8
    $region5: #{time_generate_graph.1} parent=1 // pred_fallthru
      _
    // Predicated region
    $region6: #{time_generate_graph.1} parent=1 // pred_check
      _
    $region7: #{time_generate_graph.1} parent=1 // pred_check_branch
      %24 = sbr.rel (0) target = $region9
    $region8: #{time_generate_graph.1} parent=1 // pred_region
      %26 = vsyncadd [#allocation6], 0
      %s27 = sshll.u32 %s1, 4
      %s28 = int_to_ptr.hbm [resolvable:$true] %s27
      %s29 = sshll.u32 [#allocation5], 4
      %s30 = int_to_ptr.vmem [resolvable:$true] %s29
      %35 = dma.hbm_to_vmem [thread:$0]  %s28, 256, %s30, [#allocation6], 128, 128, 8
    $region9: #{time_generate_graph.1} parent=1 // pred_fallthru
      _
    // Predicated region
    $region10: #{time_generate_graph.1} parent=1 // pred_check
      _
    $region11: #{time_generate_graph.1} parent=1 // pred_check_branch
      %37 = sbr.rel (0) target = $region13
    $region12: #{time_generate_graph.1} parent=1 // pred_region
      %39 = dma.done [#allocation3], 512
    $region13: #{time_generate_graph.1} parent=1 // pred_fallthru
      _
    // Predicated region
    $region14: #{time_generate_graph.1} parent=1 // pred_check
      _
    $region15: #{time_generate_graph.1} parent=1 // pred_check_branch
      %41 = sbr.rel (0) target = $region17
    $region16: #{time_generate_graph.1} parent=1 // pred_region
      %43 = dma.done [#allocation6], 256
    $region17: #{time_generate_graph.1} parent=1 // pred_fallthru
      _
    %v44 = vld [vmem:[#allocation2] sm:$0xff]
    %v45 = vld [vmem:[#allocation2 + $0x8] sm:$0xff]
    %46 = vrot.lane.b32.xlu0 %v44, 2
    %v47 = vpop.permute.xlu0 %46
    %48 = vrot.lane.b32.xlu0 %v45, 2
    %v49 = vpop.permute.xlu0 %48
    %50 = vrot.lane.b32.xlu0 %v44, 1
    %v51 = vpop.permute.xlu0 %50
    %52 = vrot.lane.b32.xlu0 %v45, 1
    %v53 = vpop.permute.xlu0 %52
    %54 = vrot.lane.b32.xlu0 %v44, 127
    %v55 = vpop.permute.xlu0 %54
    %56 = vrot.lane.b32.xlu0 %v45, 127
    %v57 = vpop.permute.xlu0 %56
    %58 = vrot.lane.b32.xlu0 %v44, 126
    %v59 = vpop.permute.xlu0 %58
    %60 = vrot.lane.b32.xlu0 %v45, 126
    %v61 = vpop.permute.xlu0 %60
    %s62 = scalar_lea.vmem [#allocation2], 16
    %v63 = vld [vmem:[%s62] sm:$0xff]
    %v64 = vld [vmem:[%s62 + $0x8] sm:$0xff]
    %65 = vrot.lane.b32.xlu0 %v63, 2
    %v66 = vpop.permute.xlu0 %65
    %67 = vrot.lane.b32.xlu0 %v64, 2
    %v68 = vpop.permute.xlu0 %67
    %69 = vrot.lane.b32.xlu0 %v63, 1
    %v70 = vpop.permute.xlu0 %69
    %71 = vrot.lane.b32.xlu0 %v64, 1
    %v72 = vpop.permute.xlu0 %71
    %73 = vrot.lane.b32.xlu0 %v63, 127
    %v74 = vpop.permute.xlu0 %73
    %75 = vrot.lane.b32.xlu0 %v64, 127
    %v76 = vpop.permute.xlu0 %75
    %77 = vrot.lane.b32.xlu0 %v63, 126
    %v78 = vpop.permute.xlu0 %77
    %79 = vrot.lane.b32.xlu0 %v64, 126
    %v80 = vpop.permute.xlu0 %79
    %v81 = vld [vmem:[#allocation5] sm:$0xff]
    %v82 = vld [vmem:[#allocation5 + $0x8] sm:$0xff]
    %vm83 = vcmask 654336
    %v85 = vsel %vm83, %v81, 0
    %v88 = vsel %vm83, %v82, 0
    %90 = vmatpush.msra.mxu0 0.0
    %91 = vmatpush.msra.mxu0 0.0
    %92 = vmatpush.msra.mxu0 0.0
    %93 = vmatpush.msra.mxu0 0.0
    %94 = vmatpush.msra.mxu0 0.0
    %95 = vmatpush.msra.mxu0 0.0
    %96 = vmatpush.msra.mxu0 %v61
    %97 = vmatpush.msra.mxu0 %v59
    %98 = vmatpush.msra.mxu0 %v57
    %99 = vmatpush.msra.mxu0 %v55
    %100 = vmatpush.msra.mxu0 %v45
    %101 = vmatpush.msra.mxu0 %v44
    %102 = vmatpush.msra.mxu0 %v53
    %103 = vmatpush.msra.mxu0 %v51
    %104 = vmatpush.msra.mxu0 %v49
    %105 = vmatpush.msra.mxu0 %v47
    %106 = vmatmul.f32.gmra.mxu0 %v85
    %v107 = vpop.f32.mrf.mxu0
    %v108 = vadd.f32 0.0, %v107
    %109 = vmatmul.f32.gmra.mxu0 %v88
    %v110 = vpop.f32.mrf.mxu0
    %v111 = vadd.f32 0.0, %v110
    %112 = vdwg.mxu0
    %113 = vmatpush.msra.mxu0 0.0
    %114 = vmatpush.msra.mxu0 0.0
    %115 = vmatpush.msra.mxu0 0.0
    %116 = vmatpush.msra.mxu0 0.0
    %117 = vmatpush.msra.mxu0 0.0
    %118 = vmatpush.msra.mxu0 0.0
    %119 = vmatpush.msra.mxu0 %v80
    %120 = vmatpush.msra.mxu0 %v78
    %121 = vmatpush.msra.mxu0 %v76
    %122 = vmatpush.msra.mxu0 %v74
    %123 = vmatpush.msra.mxu0 %v64
    %124 = vmatpush.msra.mxu0 %v63
    %125 = vmatpush.msra.mxu0 %v72
    %126 = vmatpush.msra.mxu0 %v70
    %127 = vmatpush.msra.mxu0 %v68
    %128 = vmatpush.msra.mxu0 %v66
    %129 = vmatmul.f32.gmra.mxu0 %v85
    %v130 = vpop.f32.mrf.mxu0
    %v131 = vadd.f32 0.0, %v130
    %132 = vmatmul.f32.gmra.mxu0 %v88
    %v133 = vpop.f32.mrf.mxu0
    %v134 = vadd.f32 0.0, %v133
    %135 = vdwg.mxu0
    %136 = vadd.xlane.f32.xlu0 %v108
    %v137 = vpop.xlane.xlu0 %136
    %138 = vadd.xlane.f32.xlu0 %v111
    %v139 = vpop.xlane.xlu0 %138
    %v140 = vmul.f32 %v137, 0.0078125
    %v141 = vmul.f32 %v139, 0.0078125
    %v142 = vsub.f32 %v108, %v140
    %v143 = vsub.f32 %v111, %v141
    %v144 = vmul.f32 %v142, %v142
    %v145 = vmul.f32 %v143, %v143
    %146 = vadd.xlane.f32.xlu0 %v144
    %v147 = vpop.xlane.xlu0 %146
    %148 = vadd.xlane.f32.xlu0 %v145
    %v149 = vpop.xlane.xlu0 %148
    %v150 = vmul.f32 %v147, 0.0078125
    %v151 = vmul.f32 %v149, 0.0078125
    %v152 = vadd.f32 %v150, 1e-05
    %v153 = vadd.f32 %v151, 1e-05
    %v154 = vrsqrt.pop %v152
    %v155 = vmul.f32 %v154, %v152
    %v156 = vmul.f32 %v155, %v154
    %v157 = vmul.f32 0.5, %v156
    %v158 = vsub.f32 1.5, %v157
    %v159 = vmul.f32 %v154, %v158
    %vm160 = vweird.f32 %v152
    %vm161 = vweird.f32 %v154
    %vm162 = vmor %vm160, %vm161
    %v163 = vsel %vm162, %v154, %v159
    %v164 = vrsqrt.pop %v153
    %v165 = vmul.f32 %v164, %v153
    %v166 = vmul.f32 %v165, %v164
    %v167 = vmul.f32 0.5, %v166
    %v168 = vsub.f32 1.5, %v167
    %v169 = vmul.f32 %v164, %v168
    %vm170 = vweird.f32 %v153
    %vm171 = vweird.f32 %v164
    %vm172 = vmor %vm170, %vm171
    %v173 = vsel %vm172, %v164, %v169
    %v174 = vmul.f32 %v163, 0.5
    %v175 = vmul.f32 %v173, 0.5
    %v176 = vmul.f32 %v142, %v174
    %v177 = vmul.f32 %v143, %v175
    %178 = vxpose.xlu0.b32.start [1/16] %v176, 128
    %179 = vxpose.xlu0.b32.cont [2/16] %v177, 128
    %180 = vxpose.xlu0.b32.cont [3/16] 0.0, 128
    %181 = vxpose.xlu0.b32.cont [4/16] 0.0, 128
    %182 = vxpose.xlu0.b32.cont [5/16] 0.0, 128
    %183 = vxpose.xlu0.b32.cont [6/16] 0.0, 128
    %184 = vxpose.xlu0.b32.cont [7/16] 0.0, 128
    %185 = vxpose.xlu0.b32.cont [8/16] 0.0, 128
    %186 = vxpose.xlu0.b32.cont [9/16] 0.0, 128
    %187 = vxpose.xlu0.b32.cont [10/16] 0.0, 128
    %188 = vxpose.xlu0.b32.cont [11/16] 0.0, 128
    %189 = vxpose.xlu0.b32.cont [12/16] 0.0, 128
    %190 = vxpose.xlu0.b32.cont [13/16] 0.0, 128
    %191 = vxpose.xlu0.b32.cont [14/16] 0.0, 128
    %192 = vxpose.xlu0.b32.cont [15/16] 0.0, 128
    %193 = vxpose.xlu0.b32.end [16/16] 0.0, 128
    %v194 = vpop.trf.xlu0
    %v195 = vpop.trf.xlu0
    %v196 = vpop.trf.xlu0
    %v197 = vpop.trf.xlu0
    %v198 = vpop.trf.xlu0
    %v199 = vpop.trf.xlu0
    %v200 = vpop.trf.xlu0
    %v201 = vpop.trf.xlu0
    %v202 = vpop.trf.xlu0
    %v203 = vpop.trf.xlu0
    %v204 = vpop.trf.xlu0
    %v205 = vpop.trf.xlu0
    %v206 = vpop.trf.xlu0
    %v207 = vpop.trf.xlu0
    %v208 = vpop.trf.xlu0
    %v209 = vpop.trf.xlu0
    %vm210 = vcmask 130048
    %v212 = vsel %vm210, %v194, 0
    %v215 = vsel %vm210, %v195, 0
    %v218 = vsel %vm210, %v196, 0
    %v221 = vsel %vm210, %v197, 0
    %v224 = vsel %vm210, %v198, 0
    %v227 = vsel %vm210, %v199, 0
    %v230 = vsel %vm210, %v200, 0
    %v233 = vsel %vm210, %v201, 0
    %v236 = vsel %vm210, %v202, 0
    %v239 = vsel %vm210, %v203, 0
    %v242 = vsel %vm210, %v204, 0
    %v245 = vsel %vm210, %v205, 0
    %v248 = vsel %vm210, %v206, 0
    %v251 = vsel %vm210, %v207, 0
    %v254 = vsel %vm210, %v208, 0
    %v257 = vsel %vm210, %v209, 0
    %259 = vmatpush.msra.mxu0 0.0
    %260 = vmatpush.msra.mxu0 0.0
    %261 = vmatpush.msra.mxu0 0.0
    %262 = vmatpush.msra.mxu0 0.0
    %263 = vmatpush.msra.mxu0 0.0
    %264 = vmatpush.msra.mxu0 0.0
    %265 = vmatpush.msra.mxu0 0.0
    %266 = vmatpush.msra.mxu0 0.0
    %267 = vmatpush.msra.mxu0 0.0
    %268 = vmatpush.msra.mxu0 0.0
    %269 = vmatpush.msra.mxu0 0.0
    %270 = vmatpush.msra.mxu0 0.0
    %271 = vmatpush.msra.mxu0 0.0
    %272 = vmatpush.msra.mxu0 0.0
    %273 = vmatpush.msra.mxu0 %v177
    %274 = vmatpush.msra.mxu0 %v176
    %275 = vmatmul.f32.gmra.mxu0 %v212
    %v276 = vpop.f32.mrf.mxu0
    %v277 = vadd.f32 0.0, %v276
    %278 = vmatmul.f32.gmra.mxu0 %v215
    %v279 = vpop.f32.mrf.mxu0
    %v280 = vadd.f32 0.0, %v279
    %281 = vmatmul.f32.gmra.mxu0 %v218
    %v282 = vpop.f32.mrf.mxu0
    %v283 = vadd.f32 0.0, %v282
    %284 = vmatmul.f32.gmra.mxu0 %v221
    %v285 = vpop.f32.mrf.mxu0
    %v286 = vadd.f32 0.0, %v285
    %287 = vmatmul.f32.gmra.mxu0 %v224
    %v288 = vpop.f32.mrf.mxu0
    %v289 = vadd.f32 0.0, %v288
    %290 = vmatmul.f32.gmra.mxu0 %v227
    %v291 = vpop.f32.mrf.mxu0
    %v292 = vadd.f32 0.0, %v291
    %293 = vmatmul.f32.gmra.mxu0 %v230
    %v294 = vpop.f32.mrf.mxu0
    %v295 = vadd.f32 0.0, %v294
    %296 = vmatmul.f32.gmra.mxu0 %v233
    %v297 = vpop.f32.mrf.mxu0
    %v298 = vadd.f32 0.0, %v297
    %299 = vmatmul.f32.gmra.mxu0 %v236
    %v300 = vpop.f32.mrf.mxu0
    %v301 = vadd.f32 0.0, %v300
    %302 = vmatmul.f32.gmra.mxu0 %v239
    %v303 = vpop.f32.mrf.mxu0
    %v304 = vadd.f32 0.0, %v303
    %305 = vmatmul.f32.gmra.mxu0 %v242
    %v306 = vpop.f32.mrf.mxu0
    %v307 = vadd.f32 0.0, %v306
    %308 = vmatmul.f32.gmra.mxu0 %v245
    %v309 = vpop.f32.mrf.mxu0
    %v310 = vadd.f32 0.0, %v309
    %311 = vmatmul.f32.gmra.mxu0 %v248
    %v312 = vpop.f32.mrf.mxu0
    %v313 = vadd.f32 0.0, %v312
    %314 = vmatmul.f32.gmra.mxu0 %v251
    %v315 = vpop.f32.mrf.mxu0
    %v316 = vadd.f32 0.0, %v315
    %317 = vmatmul.f32.gmra.mxu0 %v254
    %v318 = vpop.f32.mrf.mxu0
    %v319 = vadd.f32 0.0, %v318
    %320 = vmatmul.f32.gmra.mxu0 %v257
    %v321 = vpop.f32.mrf.mxu0
    %v322 = vadd.f32 0.0, %v321
    %323 = vdwg.mxu0
    %324 = vadd.xlane.f32.xlu0 %v131
    %v325 = vpop.xlane.xlu0 %324
    %326 = vadd.xlane.f32.xlu0 %v134
    %v327 = vpop.xlane.xlu0 %326
    %v328 = vmul.f32 %v325, 0.0078125
    %v329 = vmul.f32 %v327, 0.0078125
    %v330 = vsub.f32 %v131, %v328
    %v331 = vsub.f32 %v134, %v329
    %v332 = vmul.f32 %v330, %v330
    %v333 = vmul.f32 %v331, %v331
    %334 = vadd.xlane.f32.xlu0 %v332
    %v335 = vpop.xlane.xlu0 %334
    %336 = vadd.xlane.f32.xlu0 %v333
    %v337 = vpop.xlane.xlu0 %336
    %v338 = vmul.f32 %v335, 0.0078125
    %v339 = vmul.f32 %v337, 0.0078125
    %v340 = vadd.f32 %v338, 1e-05
    %v341 = vadd.f32 %v339, 1e-05
    %v342 = vrsqrt.pop %v340
    %v343 = vmul.f32 %v342, %v340
    %v344 = vmul.f32 %v343, %v342
    %v345 = vmul.f32 0.5, %v344
    %v346 = vsub.f32 1.5, %v345
    %v347 = vmul.f32 %v342, %v346
    %vm348 = vweird.f32 %v340
    %vm349 = vweird.f32 %v342
    %vm350 = vmor %vm348, %vm349
    %v351 = vsel %vm350, %v342, %v347
    %v352 = vrsqrt.pop %v341
    %v353 = vmul.f32 %v352, %v341
    %v354 = vmul.f32 %v353, %v352
    %v355 = vmul.f32 0.5, %v354
    %v356 = vsub.f32 1.5, %v355
    %v357 = vmul.f32 %v352, %v356
    %vm358 = vweird.f32 %v341
    %vm359 = vweird.f32 %v352
    %vm360 = vmor %vm358, %vm359
    %v361 = vsel %vm360, %v352, %v357
    %v362 = vmul.f32 %v351, 0.5
    %v363 = vmul.f32 %v361, 0.5
    %v364 = vmul.f32 %v330, %v362
    %v365 = vmul.f32 %v331, %v363
    %366 = vxpose.xlu0.b32.start [1/16] %v364, 128
    %367 = vxpose.xlu0.b32.cont [2/16] %v365, 128
    %368 = vxpose.xlu0.b32.cont [3/16] 0.0, 128
    %369 = vxpose.xlu0.b32.cont [4/16] 0.0, 128
    %370 = vxpose.xlu0.b32.cont [5/16] 0.0, 128
    %371 = vxpose.xlu0.b32.cont [6/16] 0.0, 128
    %372 = vxpose.xlu0.b32.cont [7/16] 0.0, 128
    %373 = vxpose.xlu0.b32.cont [8/16] 0.0, 128
    %374 = vxpose.xlu0.b32.cont [9/16] 0.0, 128
    %375 = vxpose.xlu0.b32.cont [10/16] 0.0, 128
    %376 = vxpose.xlu0.b32.cont [11/16] 0.0, 128
    %377 = vxpose.xlu0.b32.cont [12/16] 0.0, 128
    %378 = vxpose.xlu0.b32.cont [13/16] 0.0, 128
    %379 = vxpose.xlu0.b32.cont [14/16] 0.0, 128
    %380 = vxpose.xlu0.b32.cont [15/16] 0.0, 128
    %381 = vxpose.xlu0.b32.end [16/16] 0.0, 128
    %v382 = vpop.trf.xlu0
    %v383 = vpop.trf.xlu0
    %v384 = vpop.trf.xlu0
    %v385 = vpop.trf.xlu0
    %v386 = vpop.trf.xlu0
    %v387 = vpop.trf.xlu0
    %v388 = vpop.trf.xlu0
    %v389 = vpop.trf.xlu0
    %v390 = vpop.trf.xlu0
    %v391 = vpop.trf.xlu0
    %v392 = vpop.trf.xlu0
    %v393 = vpop.trf.xlu0
    %v394 = vpop.trf.xlu0
    %v395 = vpop.trf.xlu0
    %v396 = vpop.trf.xlu0
    %v397 = vpop.trf.xlu0
    %v399 = vsel %vm210, %v382, 0
    %v402 = vsel %vm210, %v383, 0
    %v405 = vsel %vm210, %v384, 0
    %v408 = vsel %vm210, %v385, 0
    %v411 = vsel %vm210, %v386, 0
    %v414 = vsel %vm210, %v387, 0
    %v417 = vsel %vm210, %v388, 0
    %v420 = vsel %vm210, %v389, 0
    %v423 = vsel %vm210, %v390, 0
    %v426 = vsel %vm210, %v391, 0
    %v429 = vsel %vm210, %v392, 0
    %v432 = vsel %vm210, %v393, 0
    %v435 = vsel %vm210, %v394, 0
    %v438 = vsel %vm210, %v395, 0
    %v441 = vsel %vm210, %v396, 0
    %v444 = vsel %vm210, %v397, 0
    %446 = vmatpush.msra.mxu0 0.0
    %447 = vmatpush.msra.mxu0 0.0
    %448 = vmatpush.msra.mxu0 0.0
    %449 = vmatpush.msra.mxu0 0.0
    %450 = vmatpush.msra.mxu0 0.0
    %451 = vmatpush.msra.mxu0 0.0
    %452 = vmatpush.msra.mxu0 0.0
    %453 = vmatpush.msra.mxu0 0.0
    %454 = vmatpush.msra.mxu0 0.0
    %455 = vmatpush.msra.mxu0 0.0
    %456 = vmatpush.msra.mxu0 0.0
    %457 = vmatpush.msra.mxu0 0.0
    %458 = vmatpush.msra.mxu0 0.0
    %459 = vmatpush.msra.mxu0 0.0
    %460 = vmatpush.msra.mxu0 %v365
    %461 = vmatpush.msra.mxu0 %v364
    %462 = vmatmul.f32.gmra.mxu0 %v399
    %v463 = vpop.f32.mrf.mxu0
    %v464 = vadd.f32 0.0, %v463
    %465 = vmatmul.f32.gmra.mxu0 %v402
    %v466 = vpop.f32.mrf.mxu0
    %v467 = vadd.f32 0.0, %v466
    %468 = vmatmul.f32.gmra.mxu0 %v405
    %v469 = vpop.f32.mrf.mxu0
    %v470 = vadd.f32 0.0, %v469
    %471 = vmatmul.f32.gmra.mxu0 %v408
    %v472 = vpop.f32.mrf.mxu0
    %v473 = vadd.f32 0.0, %v472
    %474 = vmatmul.f32.gmra.mxu0 %v411
    %v475 = vpop.f32.mrf.mxu0
    %v476 = vadd.f32 0.0, %v475
    %477 = vmatmul.f32.gmra.mxu0 %v414
    %v478 = vpop.f32.mrf.mxu0
    %v479 = vadd.f32 0.0, %v478
    %480 = vmatmul.f32.gmra.mxu0 %v417
    %v481 = vpop.f32.mrf.mxu0
    %v482 = vadd.f32 0.0, %v481
    %483 = vmatmul.f32.gmra.mxu0 %v420
    %v484 = vpop.f32.mrf.mxu0
    %v485 = vadd.f32 0.0, %v484
    %486 = vmatmul.f32.gmra.mxu0 %v423
    %v487 = vpop.f32.mrf.mxu0
    %v488 = vadd.f32 0.0, %v487
    %489 = vmatmul.f32.gmra.mxu0 %v426
    %v490 = vpop.f32.mrf.mxu0
    %v491 = vadd.f32 0.0, %v490
    %492 = vmatmul.f32.gmra.mxu0 %v429
    %v493 = vpop.f32.mrf.mxu0
    %v494 = vadd.f32 0.0, %v493
    %495 = vmatmul.f32.gmra.mxu0 %v432
    %v496 = vpop.f32.mrf.mxu0
    %v497 = vadd.f32 0.0, %v496
    %498 = vmatmul.f32.gmra.mxu0 %v435
    %v499 = vpop.f32.mrf.mxu0
    %v500 = vadd.f32 0.0, %v499
    %501 = vmatmul.f32.gmra.mxu0 %v438
    %v502 = vpop.f32.mrf.mxu0
    %v503 = vadd.f32 0.0, %v502
    %504 = vmatmul.f32.gmra.mxu0 %v441
    %v505 = vpop.f32.mrf.mxu0
    %v506 = vadd.f32 0.0, %v505
    %507 = vmatmul.f32.gmra.mxu0 %v444
    %v508 = vpop.f32.mrf.mxu0
    %v509 = vadd.f32 0.0, %v508
    %510 = vdwg.mxu0
    %v511 = vsub.f32 %v464, %v277
    %v512 = vsub.f32 %v467, %v280
    %v513 = vsub.f32 %v470, %v283
    %v514 = vsub.f32 %v473, %v286
    %v515 = vsub.f32 %v476, %v289
    %v516 = vsub.f32 %v479, %v292
    %v517 = vsub.f32 %v482, %v295
    %v518 = vsub.f32 %v485, %v298
    %v519 = vsub.f32 %v488, %v301
    %v520 = vsub.f32 %v491, %v304
    %v521 = vsub.f32 %v494, %v307
    %v522 = vsub.f32 %v497, %v310
    %v523 = vsub.f32 %v500, %v313
    %v524 = vsub.f32 %v503, %v316
    %v525 = vsub.f32 %v506, %v319
    %v526 = vsub.f32 %v509, %v322
    %v527 = vmul.f32 %v511, 1.442695
    %v528 = vpow.pop %v527
    %v529 = vmul.f32 %v512, 1.442695
    %v530 = vpow.pop %v529
    %v531 = vmul.f32 %v513, 1.442695
    %v532 = vpow.pop %v531
    %v533 = vmul.f32 %v514, 1.442695
    %v534 = vpow.pop %v533
    %v535 = vmul.f32 %v515, 1.442695
    %v536 = vpow.pop %v535
    %v537 = vmul.f32 %v516, 1.442695
    %v538 = vpow.pop %v537
    %v539 = vmul.f32 %v517, 1.442695
    %v540 = vpow.pop %v539
    %v541 = vmul.f32 %v518, 1.442695
    %v542 = vpow.pop %v541
    %v543 = vmul.f32 %v519, 1.442695
    %v544 = vpow.pop %v543
    %v545 = vmul.f32 %v520, 1.442695
    %v546 = vpow.pop %v545
    %v547 = vmul.f32 %v521, 1.442695
    %v548 = vpow.pop %v547
    %v549 = vmul.f32 %v522, 1.442695
    %v550 = vpow.pop %v549
    %v551 = vmul.f32 %v523, 1.442695
    %v552 = vpow.pop %v551
    %v553 = vmul.f32 %v524, 1.442695
    %v554 = vpow.pop %v553
    %v555 = vmul.f32 %v525, 1.442695
    %v556 = vpow.pop %v555
    %v557 = vmul.f32 %v526, 1.442695
    %v558 = vpow.pop %v557
    %v559 = vadd.f32 %v528, 1.0
    %v560 = vadd.f32 %v530, 1.0
    %v561 = vadd.f32 %v532, 1.0
    %v562 = vadd.f32 %v534, 1.0
    %v563 = vadd.f32 %v536, 1.0
    %v564 = vadd.f32 %v538, 1.0
    %v565 = vadd.f32 %v540, 1.0
    %v566 = vadd.f32 %v542, 1.0
    %v567 = vadd.f32 %v544, 1.0
    %v568 = vadd.f32 %v546, 1.0
    %v569 = vadd.f32 %v548, 1.0
    %v570 = vadd.f32 %v550, 1.0
    %v571 = vadd.f32 %v552, 1.0
    %v572 = vadd.f32 %v554, 1.0
    %v573 = vadd.f32 %v556, 1.0
    %v574 = vadd.f32 %v558, 1.0
    %v575 = vrcp.pop %v559
    %v576 = vmul.f32 %v559, %v575
    %v577 = vsub.f32 1.0, %v576
    %v578 = vmul.f32 %v575, %v577
    %v579 = vadd.f32 %v575, %v578
    %vm580 = vweird.f32 %v559
    %vm581 = vweird.f32 %v575
    %vm582 = vmor %vm580, %vm581
    %v583 = vsel %vm582, %v575, %v579
    %v584 = vand.u32 2147483647, %v559
    %vm585 = vcmp.eq.f32.partialorder %v584, 8.507059e+37
    %v586 = vand.u32 %v559, 2147483648
    %v587 = vor.u32 1.1754944e-38, %v586
    %v588 = vsel %vm585, %v587, %v583
    %v589 = vmul.f32 1.0, %v588
    %v590 = vrcp.pop %v560
    %v591 = vmul.f32 %v560, %v590
    %v592 = vsub.f32 1.0, %v591
    %v593 = vmul.f32 %v590, %v592
    %v594 = vadd.f32 %v590, %v593
    %vm595 = vweird.f32 %v560
    %vm596 = vweird.f32 %v590
    %vm597 = vmor %vm595, %vm596
    %v598 = vsel %vm597, %v590, %v594
    %v599 = vand.u32 2147483647, %v560
    %vm600 = vcmp.eq.f32.partialorder %v599, 8.507059e+37
    %v601 = vand.u32 %v560, 2147483648
    %v602 = vor.u32 1.1754944e-38, %v601
    %v603 = vsel %vm600, %v602, %v598
    %v604 = vmul.f32 1.0, %v603
    %v605 = vrcp.pop %v561
    %v606 = vmul.f32 %v561, %v605
    %v607 = vsub.f32 1.0, %v606
    %v608 = vmul.f32 %v605, %v607
    %v609 = vadd.f32 %v605, %v608
    %vm610 = vweird.f32 %v561
    %vm611 = vweird.f32 %v605
    %vm612 = vmor %vm610, %vm611
    %v613 = vsel %vm612, %v605, %v609
    %v614 = vand.u32 2147483647, %v561
    %vm615 = vcmp.eq.f32.partialorder %v614, 8.507059e+37
    %v616 = vand.u32 %v561, 2147483648
    %v617 = vor.u32 1.1754944e-38, %v616
    %v618 = vsel %vm615, %v617, %v613
    %v619 = vmul.f32 1.0, %v618
    %v620 = vrcp.pop %v562
    %v621 = vmul.f32 %v562, %v620
    %v622 = vsub.f32 1.0, %v621
    %v623 = vmul.f32 %v620, %v622
    %v624 = vadd.f32 %v620, %v623
    %vm625 = vweird.f32 %v562
    %vm626 = vweird.f32 %v620
    %vm627 = vmor %vm625, %vm626
    %v628 = vsel %vm627, %v620, %v624
    %v629 = vand.u32 2147483647, %v562
    %vm630 = vcmp.eq.f32.partialorder %v629, 8.507059e+37
    %v631 = vand.u32 %v562, 2147483648
    %v632 = vor.u32 1.1754944e-38, %v631
    %v633 = vsel %vm630, %v632, %v628
    %v634 = vmul.f32 1.0, %v633
    %v635 = vrcp.pop %v563
    %v636 = vmul.f32 %v563, %v635
    %v637 = vsub.f32 1.0, %v636
    %v638 = vmul.f32 %v635, %v637
    %v639 = vadd.f32 %v635, %v638
    %vm640 = vweird.f32 %v563
    %vm641 = vweird.f32 %v635
    %vm642 = vmor %vm640, %vm641
    %v643 = vsel %vm642, %v635, %v639
    %v644 = vand.u32 2147483647, %v563
    %vm645 = vcmp.eq.f32.partialorder %v644, 8.507059e+37
    %v646 = vand.u32 %v563, 2147483648
    %v647 = vor.u32 1.1754944e-38, %v646
    %v648 = vsel %vm645, %v647, %v643
    %v649 = vmul.f32 1.0, %v648
    %v650 = vrcp.pop %v564
    %v651 = vmul.f32 %v564, %v650
    %v652 = vsub.f32 1.0, %v651
    %v653 = vmul.f32 %v650, %v652
    %v654 = vadd.f32 %v650, %v653
    %vm655 = vweird.f32 %v564
    %vm656 = vweird.f32 %v650
    %vm657 = vmor %vm655, %vm656
    %v658 = vsel %vm657, %v650, %v654
    %v659 = vand.u32 2147483647, %v564
    %vm660 = vcmp.eq.f32.partialorder %v659, 8.507059e+37
    %v661 = vand.u32 %v564, 2147483648
    %v662 = vor.u32 1.1754944e-38, %v661
    %v663 = vsel %vm660, %v662, %v658
    %v664 = vmul.f32 1.0, %v663
    %v665 = vrcp.pop %v565
    %v666 = vmul.f32 %v565, %v665
    %v667 = vsub.f32 1.0, %v666
    %v668 = vmul.f32 %v665, %v667
    %v669 = vadd.f32 %v665, %v668
    %vm670 = vweird.f32 %v565
    %vm671 = vweird.f32 %v665
    %vm672 = vmor %vm670, %vm671
    %v673 = vsel %vm672, %v665, %v669
    %v674 = vand.u32 2147483647, %v565
    %vm675 = vcmp.eq.f32.partialorder %v674, 8.507059e+37
    %v676 = vand.u32 %v565, 2147483648
    %v677 = vor.u32 1.1754944e-38, %v676
    %v678 = vsel %vm675, %v677, %v673
    %v679 = vmul.f32 1.0, %v678
    %v680 = vrcp.pop %v566
    %v681 = vmul.f32 %v566, %v680
    %v682 = vsub.f32 1.0, %v681
    %v683 = vmul.f32 %v680, %v682
    %v684 = vadd.f32 %v680, %v683
    %vm685 = vweird.f32 %v566
    %vm686 = vweird.f32 %v680
    %vm687 = vmor %vm685, %vm686
    %v688 = vsel %vm687, %v680, %v684
    %v689 = vand.u32 2147483647, %v566
    %vm690 = vcmp.eq.f32.partialorder %v689, 8.507059e+37
    %v691 = vand.u32 %v566, 2147483648
    %v692 = vor.u32 1.1754944e-38, %v691
    %v693 = vsel %vm690, %v692, %v688
    %v694 = vmul.f32 1.0, %v693
    %v695 = vrcp.pop %v567
    %v696 = vmul.f32 %v567, %v695
    %v697 = vsub.f32 1.0, %v696
    %v698 = vmul.f32 %v695, %v697
    %v699 = vadd.f32 %v695, %v698
    %vm700 = vweird.f32 %v567
    %vm701 = vweird.f32 %v695
    %vm702 = vmor %vm700, %vm701
    %v703 = vsel %vm702, %v695, %v699
    %v704 = vand.u32 2147483647, %v567
    %vm705 = vcmp.eq.f32.partialorder %v704, 8.507059e+37
    %v706 = vand.u32 %v567, 2147483648
    %v707 = vor.u32 1.1754944e-38, %v706
    %v708 = vsel %vm705, %v707, %v703
    %v709 = vmul.f32 1.0, %v708
    %v710 = vrcp.pop %v568
    %v711 = vmul.f32 %v568, %v710
    %v712 = vsub.f32 1.0, %v711
    %v713 = vmul.f32 %v710, %v712
    %v714 = vadd.f32 %v710, %v713
    %vm715 = vweird.f32 %v568
    %vm716 = vweird.f32 %v710
    %vm717 = vmor %vm715, %vm716
    %v718 = vsel %vm717, %v710, %v714
    %v719 = vand.u32 2147483647, %v568
    %vm720 = vcmp.eq.f32.partialorder %v719, 8.507059e+37
    %v721 = vand.u32 %v568, 2147483648
    %v722 = vor.u32 1.1754944e-38, %v721
    %v723 = vsel %vm720, %v722, %v718
    %v724 = vmul.f32 1.0, %v723
    %v725 = vrcp.pop %v569
    %v726 = vmul.f32 %v569, %v725
    %v727 = vsub.f32 1.0, %v726
    %v728 = vmul.f32 %v725, %v727
    %v729 = vadd.f32 %v725, %v728
    %vm730 = vweird.f32 %v569
    %vm731 = vweird.f32 %v725
    %vm732 = vmor %vm730, %vm731
    %v733 = vsel %vm732, %v725, %v729
    %v734 = vand.u32 2147483647, %v569
    %vm735 = vcmp.eq.f32.partialorder %v734, 8.507059e+37
    %v736 = vand.u32 %v569, 2147483648
    %v737 = vor.u32 1.1754944e-38, %v736
    %v738 = vsel %vm735, %v737, %v733
    %v739 = vmul.f32 1.0, %v738
    %v740 = vrcp.pop %v570
    %v741 = vmul.f32 %v570, %v740
    %v742 = vsub.f32 1.0, %v741
    %v743 = vmul.f32 %v740, %v742
    %v744 = vadd.f32 %v740, %v743
    %vm745 = vweird.f32 %v570
    %vm746 = vweird.f32 %v740
    %vm747 = vmor %vm745, %vm746
    %v748 = vsel %vm747, %v740, %v744
    %v749 = vand.u32 2147483647, %v570
    %vm750 = vcmp.eq.f32.partialorder %v749, 8.507059e+37
    %v751 = vand.u32 %v570, 2147483648
    %v752 = vor.u32 1.1754944e-38, %v751
    %v753 = vsel %vm750, %v752, %v748
    %v754 = vmul.f32 1.0, %v753
    %v755 = vrcp.pop %v571
    %v756 = vmul.f32 %v571, %v755
    %v757 = vsub.f32 1.0, %v756
    %v758 = vmul.f32 %v755, %v757
    %v759 = vadd.f32 %v755, %v758
    %vm760 = vweird.f32 %v571
    %vm761 = vweird.f32 %v755
    %vm762 = vmor %vm760, %vm761
    %v763 = vsel %vm762, %v755, %v759
    %v764 = vand.u32 2147483647, %v571
    %vm765 = vcmp.eq.f32.partialorder %v764, 8.507059e+37
    %v766 = vand.u32 %v571, 2147483648
    %v767 = vor.u32 1.1754944e-38, %v766
    %v768 = vsel %vm765, %v767, %v763
    %v769 = vmul.f32 1.0, %v768
    %v770 = vrcp.pop %v572
    %v771 = vmul.f32 %v572, %v770
    %v772 = vsub.f32 1.0, %v771
    %v773 = vmul.f32 %v770, %v772
    %v774 = vadd.f32 %v770, %v773
    %vm775 = vweird.f32 %v572
    %vm776 = vweird.f32 %v770
    %vm777 = vmor %vm775, %vm776
    %v778 = vsel %vm777, %v770, %v774
    %v779 = vand.u32 2147483647, %v572
    %vm780 = vcmp.eq.f32.partialorder %v779, 8.507059e+37
    %v781 = vand.u32 %v572, 2147483648
    %v782 = vor.u32 1.1754944e-38, %v781
    %v783 = vsel %vm780, %v782, %v778
    %v784 = vmul.f32 1.0, %v783
    %v785 = vrcp.pop %v573
    %v786 = vmul.f32 %v573, %v785
    %v787 = vsub.f32 1.0, %v786
    %v788 = vmul.f32 %v785, %v787
    %v789 = vadd.f32 %v785, %v788
    %vm790 = vweird.f32 %v573
    %vm791 = vweird.f32 %v785
    %vm792 = vmor %vm790, %vm791
    %v793 = vsel %vm792, %v785, %v789
    %v794 = vand.u32 2147483647, %v573
    %vm795 = vcmp.eq.f32.partialorder %v794, 8.507059e+37
    %v796 = vand.u32 %v573, 2147483648
    %v797 = vor.u32 1.1754944e-38, %v796
    %v798 = vsel %vm795, %v797, %v793
    %v799 = vmul.f32 1.0, %v798
    %v800 = vrcp.pop %v574
    %v801 = vmul.f32 %v574, %v800
    %v802 = vsub.f32 1.0, %v801
    %v803 = vmul.f32 %v800, %v802
    %v804 = vadd.f32 %v800, %v803
    %vm805 = vweird.f32 %v574
    %vm806 = vweird.f32 %v800
    %vm807 = vmor %vm805, %vm806
    %v808 = vsel %vm807, %v800, %v804
    %v809 = vand.u32 2147483647, %v574
    %vm810 = vcmp.eq.f32.partialorder %v809, 8.507059e+37
    %v811 = vand.u32 %v574, 2147483648
    %v812 = vor.u32 1.1754944e-38, %v811
    %v813 = vsel %vm810, %v812, %v808
    %v814 = vmul.f32 1.0, %v813
    %815 = vst [vmem:[#allocation7] sm:$0xff] %v589
    %816 = vst [vmem:[#allocation7 + $0x8] sm:$0xff] %v604
    %817 = vst [vmem:[#allocation7 + $0x10] sm:$0xff] %v619
    %818 = vst [vmem:[#allocation7 + $0x18] sm:$0xff] %v634
    %819 = vst [vmem:[#allocation7 + $0x20] sm:$0xff] %v649
    %820 = vst [vmem:[#allocation7 + $0x28] sm:$0xff] %v664
    %821 = vst [vmem:[#allocation7 + $0x30] sm:$0xff] %v679
    %822 = vst [vmem:[#allocation7 + $0x38] sm:$0xff] %v694
    %823 = vst [vmem:[#allocation7 + $0x40] sm:$0xff] %v709
    %824 = vst [vmem:[#allocation7 + $0x48] sm:$0xff] %v724
    %825 = vst [vmem:[#allocation7 + $0x50] sm:$0xff] %v739
    %826 = vst [vmem:[#allocation7 + $0x58] sm:$0xff] %v754
    %827 = vst [vmem:[#allocation7 + $0x60] sm:$0xff] %v769
    %828 = vst [vmem:[#allocation7 + $0x68] sm:$0xff] %v784
    %829 = vst [vmem:[#allocation7 + $0x70] sm:$0xff] %v799
    %830 = vst [vmem:[#allocation7 + $0x78] sm:$0xff] %v814
    %v831 = vsub.f32 1.0, %v589
    %v832 = vsub.f32 1.0, %v604
    %v833 = vsub.f32 1.0, %v619
    %v834 = vsub.f32 1.0, %v634
    %v835 = vsub.f32 1.0, %v649
    %v836 = vsub.f32 1.0, %v664
    %v837 = vsub.f32 1.0, %v679
    %v838 = vsub.f32 1.0, %v694
    %v839 = vsub.f32 1.0, %v709
    %v840 = vsub.f32 1.0, %v724
    %v841 = vsub.f32 1.0, %v739
    %v842 = vsub.f32 1.0, %v754
    %v843 = vsub.f32 1.0, %v769
    %v844 = vsub.f32 1.0, %v784
    %v845 = vsub.f32 1.0, %v799
    %v846 = vsub.f32 1.0, %v814
    %s847 = scalar_lea.vmem [#allocation7], 128
    %848 = vst [vmem:[%s847] sm:$0xff] %v831
    %849 = vst [vmem:[%s847 + $0x8] sm:$0xff] %v832
    %850 = vst [vmem:[%s847 + $0x10] sm:$0xff] %v833
    %851 = vst [vmem:[%s847 + $0x18] sm:$0xff] %v834
    %852 = vst [vmem:[%s847 + $0x20] sm:$0xff] %v835
    %853 = vst [vmem:[%s847 + $0x28] sm:$0xff] %v836
    %854 = vst [vmem:[%s847 + $0x30] sm:$0xff] %v837
    %855 = vst [vmem:[%s847 + $0x38] sm:$0xff] %v838
    %856 = vst [vmem:[%s847 + $0x40] sm:$0xff] %v839
    %857 = vst [vmem:[%s847 + $0x48] sm:$0xff] %v840
    %858 = vst [vmem:[%s847 + $0x50] sm:$0xff] %v841
    %859 = vst [vmem:[%s847 + $0x58] sm:$0xff] %v842
    %860 = vst [vmem:[%s847 + $0x60] sm:$0xff] %v843
    %861 = vst [vmem:[%s847 + $0x68] sm:$0xff] %v844
    %862 = vst [vmem:[%s847 + $0x70] sm:$0xff] %v845
    %863 = vst [vmem:[%s847 + $0x78] sm:$0xff] %v846
    // Predicated region
    $region18: #{time_generate_graph.1} parent=1 // pred_check
      _
    $region19: #{time_generate_graph.1} parent=1 // pred_check_branch
      %865 = sbr.rel (0) target = $region21
    $region20: #{time_generate_graph.1} parent=1 // pred_region
      %867 = vsyncadd [#allocation4], 0
      %s868 = sshll.u32 [#allocation7], 4
      %s869 = int_to_ptr.vmem [resolvable:$true] %s868
      %s870 = sshll.u32 %s2, 4
      %s871 = int_to_ptr.hbm [resolvable:$true] %s870
      %876 = dma.vmem_to_hbm [thread:$0]  %s869, 4096, %s871, [#allocation4], 128, 128, 8
    $region21: #{time_generate_graph.1} parent=1 // pred_fallthru
      _
    // Predicated region
    $region22: #{time_generate_graph.1} parent=1 // pred_check
      _
    $region23: #{time_generate_graph.1} parent=1 // pred_check_branch
      %878 = sbr.rel (0) target = $region25
    $region24: #{time_generate_graph.1} parent=1 // pred_region
      %880 = dma.done [#allocation4], 4096
    $region25: #{time_generate_graph.1} parent=1 // pred_fallthru
      _
    %881 = vsyncpa [#allocation3], 1
    %882 = vsyncpa [#allocation6], 1
    %883 = vsyncpa [#allocation4], 1

</llo_original>
